<compile_context>
chip_gen: v6e
topology: v6e:2x2x1
jax: 0.10.0
libtpu: 0.0.40
codegen_flags: <defaults>
</compile_context>

<pallas_src>
import functools
import math

import jax
import jax.numpy as jnp
from jax import lax
from jax.experimental import pallas as pl
from jax.experimental.pallas import tpu as pltpu

_EPS = 1e-5
_LANE = 128
_MiB = 1024 * 1024
# ~1M elements (~4 MiB of f32) per input per grid step.
_TARGET_BLOCK_ELEMS = 1024 * 1024


def _num_tensorcores():
    """2 TensorCores per chip on v4 / v5p / v7x, 1 on v5e / v6e."""
    try:
        kind = jax.devices()[0].device_kind.lower()
    except Exception:
        return 1
    return 2 if any(tag in kind for tag in ("v4", "v5p", "v7")) else 1


def _dice_kernel(p_ref, t_ref, out_ref, inter_acc, union_acc, *,
                 n_blocks, blocks_per_split, block_rows, lanes, rows,
                 needs_mask):
    """Accumulate sum(sigmoid(p)*t) and sum(sigmoid(p)+t) for one split.

    p_ref, t_ref : (block_rows, lanes) VMEM input tiles
    out_ref      : (8, 128) VMEM output block; [0,0]=intersection, [0,1]=union
    inter_acc,
    union_acc    : (acc_rows, lanes) f32 VMEM accumulators
    """
    s = pl.program_id(0)   # split (parallel axis)
    j = pl.program_id(1)   # reduction step within the split

    @pl.when(j == 0)
    def _init():
        inter_acc[...] = jnp.zeros_like(inter_acc)
        union_acc[...] = jnp.zeros_like(union_acc)

    x = p_ref[...].astype(jnp.float32)
    t = t_ref[...].astype(jnp.float32)

    def _sigmoid(v):
        # Explicit tanh form: one EUP op + 2 VALU ops (== sigmoid(v)).
        return 0.5 * jnp.tanh(0.5 * v) + 0.5

    def _accumulate(pre, tt):
        prod = pre * tt
        tot = pre + tt
        if block_rows % 8 == 0 and block_rows > 8:
            # Sublane-aligned partial reduce (pure vreg+vreg VPU adds) into the
            # small (8, lanes) accumulators; frees VMEM for bigger input tiles
            # and avoids a full-block accumulator load/store per step.
            g = block_rows // 8
            inter_acc[...] += jnp.sum(prod.reshape(g, 8, lanes), axis=0)
            union_acc[...] += jnp.sum(tot.reshape(g, 8, lanes), axis=0)
        else:
            inter_acc[...] += prod
            union_acc[...] += tot

    if needs_mask:
        blk = s * blocks_per_split + j          # logical (unclamped) block id
        is_interior = blk < (n_blocks - 1)

        @pl.when(is_interior)
        def _fast():
            _accumulate(_sigmoid(x), t)

        @pl.when(jnp.logical_not(is_interior))
        def _tail():
            # Only the final logical block (and clamped out-of-range split
            # steps, which also land here) pays for the masking.
            grow = blk * block_rows + lax.broadcasted_iota(
                jnp.int32, (block_rows, lanes), 0)
            valid = grow < rows
            pre = jnp.where(valid, _sigmoid(x), 0.0)
            tt = jnp.where(valid, t, 0.0)
            _accumulate(pre, tt)
    else:
        _accumulate(_sigmoid(x), t)

    @pl.when(j == pl.num_programs(1) - 1)
    def _finalize():
        inter = jnp.sum(inter_acc[...])
        union = jnp.sum(union_acc[...])
        sub = lax.broadcasted_iota(jnp.int32, (8, 128), 0)
        ln = lax.broadcasted_iota(jnp.int32, (8, 128), 1)
        out_ref[...] = jnp.where(
            (sub == 0) & (ln == 0), inter,
            jnp.where((sub == 0) & (ln == 1), union, 0.0))


@functools.partial(jax.jit, static_argnames=("block_elems", "num_splits"))
def dice_loss(predict, target, *, block_elems=_TARGET_BLOCK_ELEMS,
              num_splits=None):
    assert predict.shape == target.shape, (
        "the size of predict and target must be equal.")
    total = math.prod(predict.shape)

    # The kernel upcasts to f32 internally, so bf16/f16 predict and
    # bf16/int8 target stream at their native (narrow) width.
    p_flat = predict.reshape(-1)
    t_flat = target.reshape(-1)
    if p_flat.dtype == jnp.bool_:
        p_flat = p_flat.astype(jnp.uint8)
    if t_flat.dtype == jnp.bool_:
        t_flat = t_flat.astype(jnp.uint8)

    rem = total % _LANE
    main = total - rem

    if main == 0:
        # Tiny input: no kernel needed.
        pre = jax.nn.sigmoid(p_flat.astype(jnp.float32))
        tt = t_flat.astype(jnp.float32)
        inter = jnp.sum(pre * tt)
        union = jnp.sum(pre + tt)
        return 1.0 - (2.0 * inter + _EPS) / (union + _EPS)

    # TODO(synk): the prefix slice on the rare numel % 128 != 0 path may still
    # materialize an XLA copy; a fully zero-copy route would need manual HBM
    # DMA of the ragged tail.
    p_main = p_flat[:main] if rem else p_flat
    t_main = t_flat[:main] if rem else t_flat

    lanes = _LANE
    for cand in (2048, 1024, 512, 256):
        if main % cand == 0:
            lanes = cand
            break
    rows = main // lanes
    p2 = p_main.reshape(rows, lanes)
    t2 = t_main.reshape(rows, lanes)

    # Row-block size: ~block_elems elements, a multiple of 32 sublanes (so
    # bf16/int8 sublane packing tiles cleanly), capped so the double-buffered
    # input streams stay within a ~32 MiB VMEM budget.
    itemsize = p2.dtype.itemsize + t2.dtype.itemsize
    budget_elems = (32 * _MiB) // (2 * itemsize)     # 2x for double buffering
    elems = max(min(block_elems, budget_elems), 32 * lanes)
    br = max((elems // lanes) // 32 * 32, 32)
    block_rows = rows if rows <= br else br

    n_blocks = pl.cdiv(rows, block_rows)
    if num_splits is None:
        num_splits = _num_tensorcores()
    n_splits = num_splits if (num_splits > 1 and n_blocks >= num_splits) else 1
    blocks_per_split = pl.cdiv(n_blocks, n_splits)

    needs_mask = (n_splits * blocks_per_split * block_rows) != rows
    last_block = n_blocks - 1
    acc_rows = 8 if (block_rows % 8 == 0 and block_rows > 8) else block_rows

    def in_index_map(s, j):
        # Clamp so an out-of-range split tail never issues an OOB DMA; the
        # in-kernel mask (keyed off the *logical* block id) zeroes those reads.
        return (jnp.minimum(s * blocks_per_split + j, last_block), 0)

    # Explicit scoped-VMEM limit: 2 double-buffered input tiles + accumulators
    # + headroom for elementwise temporaries, kept well under v7x's 64 MiB.
    block_bytes = block_rows * lanes * itemsize
    vmem_limit = 2 * block_bytes + 2 * acc_rows * lanes * 4 + 24 * _MiB
    vmem_limit = int(min(max(vmem_limit, 32 * _MiB), 48 * _MiB))

    kernel = functools.partial(
        _dice_kernel,
        n_blocks=n_blocks, blocks_per_split=blocks_per_split,
        block_rows=block_rows, lanes=lanes, rows=rows, needs_mask=needs_mask)

    partials = pl.pallas_call(
        kernel,
        out_shape=jax.ShapeDtypeStruct((n_splits * 8, 128), jnp.float32),
        grid_spec=pltpu.PrefetchScalarGridSpec(
            num_scalar_prefetch=0,
            grid=(n_splits, blocks_per_split),
            in_specs=[
                pl.BlockSpec((block_rows, lanes), in_index_map),
                pl.BlockSpec((block_rows, lanes), in_index_map),
            ],
            out_specs=pl.BlockSpec((8, 128), lambda s, j: (s, 0)),
            scratch_shapes=[
                pltpu.VMEM((acc_rows, lanes), jnp.float32),
                pltpu.VMEM((acc_rows, lanes), jnp.float32),
            ],
        ),
        # TODO(synk): verify in a trace that the size-2 leading axis really
        # lands on both v7x TensorCores; if not, switch it to
        # pltpu.CORE_PARALLEL.
        compiler_params=pltpu.CompilerParams(
            dimension_semantics=("parallel", "arbitrary"),
            vmem_limit_bytes=vmem_limit),
    )(p2, t2)

    partials = partials.reshape(n_splits, 8, 128)
    inter = jnp.sum(partials[:, 0, 0])
    union = jnp.sum(partials[:, 0, 1])

    if rem:
        # <=127 leftover elements: plain JAX, no full-tensor pad copy.
        p_tail = p_flat[main:].astype(jnp.float32)
        t_tail = t_flat[main:].astype(jnp.float32)
        pre_tail = jax.nn.sigmoid(p_tail)
        inter = inter + jnp.sum(pre_tail * t_tail)
        union = union + jnp.sum(pre_tail + t_tail)

    return 1.0 - (2.0 * inter + _EPS) / (union + _EPS)


def _dice_loss_ref(predict, target):
    num = predict.shape[0]
    pre = jax.nn.sigmoid(predict).reshape(num, -1)
    tar = target.reshape(num, -1)
    inter = jnp.sum(jnp.sum(pre * tar, axis=-1))
    union = jnp.sum(jnp.sum(pre + tar, axis=-1))
    return 1.0 - (2.0 * inter + _EPS) / (union + _EPS)


if __name__ == "__main__":
    key = jax.random.PRNGKey(0)
    k1, k2, k3, k4 = jax.random.split(key, 4)

    # NCHW, small shapes like the PyTorch module: batch=2, channels=4, 16x16.
    predict = jax.random.normal(k1, (2, 4, 16, 16), dtype=jnp.float32)
    target = (jax.random.uniform(k2, (2, 4, 16, 16)) > 0.5).astype(jnp.float32)

    loss = dice_loss(predict, target)
    jax.block_until_ready(loss)
    ref = _dice_loss_ref(predict, target)
    assert jnp.allclose(loss, ref, atol=1e-5, rtol=1e-4), (loss, ref)

    # Exercises the multi-block masked-tail path, the split machinery with a
    # clamped out-of-range step, and the <128-element remainder handled in the
    # wrapper (numel = 8640, numel % 128 == 64).
    predict2 = jax.random.normal(k3, (3, 5, 24, 24), dtype=jnp.float32)
    target2 = (jax.random.uniform(k4, (3, 5, 24, 24)) > 0.5).astype(jnp.float32)
    loss2 = dice_loss(predict2, target2, block_elems=4096, num_splits=2)
    jax.block_until_ready(loss2)
    ref2 = _dice_loss_ref(predict2, target2)
    assert jnp.allclose(loss2, ref2, atol=1e-5, rtol=1e-4), (loss2, ref2)

    print("KERNEL_OK")
</pallas_src>

<mosaic_0001>
module attributes {stable_mosaic.version = 11 : i64} {
  func.func @_dice_kernel(%arg0: i32, %arg1: i32, %arg2: memref<1x2048xf32, #tpu.memory_space<vmem>>, %arg3: memref<1x2048xf32, #tpu.memory_space<vmem>>, %arg4: memref<8x128xf32, #tpu.memory_space<vmem>>, %arg5: memref<1x2048xf32, #tpu.memory_space<vmem>>, %arg6: memref<1x2048xf32, #tpu.memory_space<vmem>>) attributes {dimension_semantics = [#tpu.dimension_semantics<parallel>, #tpu.dimension_semantics<arbitrary>], iteration_bounds = array<i64: 1, 1>, scalar_prefetch = 0 : i64, scratch_operands = 2 : i64, tpu.core_type = #tpu.core_type<tc>, window_params = [{transform_indices = @transform_0, window_bounds = array<i64: 1, 2048>}, {transform_indices = @transform_1, window_bounds = array<i64: 1, 2048>}, {transform_indices = @transform_2, window_bounds = array<i64: 8, 128>}]} {
    %c0_i32 = arith.constant 0 : i32
    %0 = arith.cmpi eq, %arg1, %c0_i32 : i32
    %1 = arith.extui %0 : i1 to i32
    %c0_i32_0 = arith.constant 0 : i32
    %2 = arith.cmpi ne, %1, %c0_i32_0 : i32
    scf.if %2 {
      %cst_16 = arith.constant 0.000000e+00 : f32
      %23 = vector.broadcast %cst_16 : f32 to vector<1x2048xf32>
      %c0_17 = arith.constant 0 : index
      %c0_18 = arith.constant 0 : index
      %24 = vector.load %arg5[%c0_17, %c0_18] : memref<1x2048xf32, #tpu.memory_space<vmem>>, vector<1x2048xf32>
      tpu.vector_store %arg5[%c0_17, %c0_18], %23 {strides = array<i32>} : memref<1x2048xf32, #tpu.memory_space<vmem>>, vector<1x2048xf32>,
      %cst_19 = arith.constant 0.000000e+00 : f32
      %25 = vector.broadcast %cst_19 : f32 to vector<1x2048xf32>
      %c0_20 = arith.constant 0 : index
      %c0_21 = arith.constant 0 : index
      %26 = vector.load %arg6[%c0_20, %c0_21] : memref<1x2048xf32, #tpu.memory_space<vmem>>, vector<1x2048xf32>
      tpu.vector_store %arg6[%c0_20, %c0_21], %25 {strides = array<i32>} : memref<1x2048xf32, #tpu.memory_space<vmem>>, vector<1x2048xf32>,
    } else {
    }
    %c0 = arith.constant 0 : index
    %c0_1 = arith.constant 0 : index
    %3 = vector.load %arg2[%c0, %c0_1] : memref<1x2048xf32, #tpu.memory_space<vmem>>, vector<1x2048xf32>
    %c0_2 = arith.constant 0 : index
    %c0_3 = arith.constant 0 : index
    %4 = vector.load %arg3[%c0_2, %c0_3] : memref<1x2048xf32, #tpu.memory_space<vmem>>, vector<1x2048xf32>
    %cst = arith.constant 5.000000e-01 : f32
    %5 = vector.broadcast %cst : f32 to vector<1x2048xf32>
    %6 = arith.mulf %5, %3 : vector<1x2048xf32>
    %7 = math.tanh %6 : vector<1x2048xf32>
    %cst_4 = arith.constant 5.000000e-01 : f32
    %8 = vector.broadcast %cst_4 : f32 to vector<1x2048xf32>
    %9 = arith.mulf %8, %7 : vector<1x2048xf32>
    %cst_5 = arith.constant 5.000000e-01 : f32
    %10 = vector.broadcast %cst_5 : f32 to vector<1x2048xf32>
    %11 = arith.addf %9, %10 : vector<1x2048xf32>
    %12 = arith.mulf %11, %4 : vector<1x2048xf32>
    %13 = arith.addf %11, %4 : vector<1x2048xf32>
    %c0_6 = arith.constant 0 : index
    %c0_7 = arith.constant 0 : index
    %14 = vector.load %arg5[%c0_6, %c0_7] : memref<1x2048xf32, #tpu.memory_space<vmem>>, vector<1x2048xf32>
    %15 = arith.addf %14, %12 : vector<1x2048xf32>
    %c0_8 = arith.constant 0 : index
    %c0_9 = arith.constant 0 : index
    %16 = vector.load %arg5[%c0_8, %c0_9] : memref<1x2048xf32, #tpu.memory_space<vmem>>, vector<1x2048xf32>
    tpu.vector_store %arg5[%c0_8, %c0_9], %15 {strides = array<i32>} : memref<1x2048xf32, #tpu.memory_space<vmem>>, vector<1x2048xf32>,
    %c0_10 = arith.constant 0 : index
    %c0_11 = arith.constant 0 : index
    %17 = vector.load %arg6[%c0_10, %c0_11] : memref<1x2048xf32, #tpu.memory_space<vmem>>, vector<1x2048xf32>
    %18 = arith.addf %17, %13 : vector<1x2048xf32>
    %c0_12 = arith.constant 0 : index
    %c0_13 = arith.constant 0 : index
    %19 = vector.load %arg6[%c0_12, %c0_13] : memref<1x2048xf32, #tpu.memory_space<vmem>>, vector<1x2048xf32>
    tpu.vector_store %arg6[%c0_12, %c0_13], %18 {strides = array<i32>} : memref<1x2048xf32, #tpu.memory_space<vmem>>, vector<1x2048xf32>,
    %c0_i32_14 = arith.constant 0 : i32
    %20 = arith.cmpi eq, %arg1, %c0_i32_14 : i32
    %21 = arith.extui %20 : i1 to i32
    %c0_i32_15 = arith.constant 0 : i32
    %22 = arith.cmpi ne, %21, %c0_i32_15 : i32
    scf.if %22 {
      %c0_16 = arith.constant 0 : index
      %c0_17 = arith.constant 0 : index
      %23 = vector.load %arg5[%c0_16, %c0_17] : memref<1x2048xf32, #tpu.memory_space<vmem>>, vector<1x2048xf32>
      %24 = vector.shape_cast %23 : vector<1x2048xf32> to vector<1x1x2048xf32>
      %cst_18 = arith.constant dense<0.000000e+00> : vector<1xf32>
      %25 = vector.multi_reduction <add>, %24, %cst_18 [1, 2] : vector<1x1x2048xf32> to vector<1xf32>
      %26 = vector.shape_cast %25 : vector<1xf32> to vector<1x1x1xf32>
      %27 = vector.extract %26[0, 0, 0] : f32 from vector<1x1x1xf32>
      %c0_19 = arith.constant 0 : index
      %c0_20 = arith.constant 0 : index
      %28 = vector.load %arg6[%c0_19, %c0_20] : memref<1x2048xf32, #tpu.memory_space<vmem>>, vector<1x2048xf32>
      %29 = vector.shape_cast %28 : vector<1x2048xf32> to vector<1x1x2048xf32>
      %cst_21 = arith.constant dense<0.000000e+00> : vector<1xf32>
      %30 = vector.multi_reduction <add>, %29, %cst_21 [1, 2] : vector<1x1x2048xf32> to vector<1xf32>
      %31 = vector.shape_cast %30 : vector<1xf32> to vector<1x1x1xf32>
      %32 = vector.extract %31[0, 0, 0] : f32 from vector<1x1x1xf32>
      %33 = tpu.iota {dimensions = array<i32: 0>} : vector<8x128xi32>
      %34 = tpu.iota {dimensions = array<i32: 1>} : vector<8x128xi32>
      %c0_i32_22 = arith.constant 0 : i32
      %35 = vector.broadcast %c0_i32_22 : i32 to vector<8x128xi32>
      %36 = arith.cmpi eq, %33, %35 : vector<8x128xi32>
      %c0_i32_23 = arith.constant 0 : i32
      %37 = vector.broadcast %c0_i32_23 : i32 to vector<8x128xi32>
      %38 = arith.cmpi eq, %34, %37 : vector<8x128xi32>
      %39 = arith.andi %36, %38 : vector<8x128xi1>
      %c0_i32_24 = arith.constant 0 : i32
      %40 = vector.broadcast %c0_i32_24 : i32 to vector<8x128xi32>
      %41 = arith.cmpi eq, %33, %40 : vector<8x128xi32>
      %c1_i32 = arith.constant 1 : i32
      %42 = vector.broadcast %c1_i32 : i32 to vector<8x128xi32>
      %43 = arith.cmpi eq, %34, %42 : vector<8x128xi32>
      %44 = arith.andi %41, %43 : vector<8x128xi1>
      %cst_25 = arith.constant 0.000000e+00 : f32
      %45 = vector.broadcast %32 : f32 to vector<8x128xf32>
      %46 = vector.broadcast %cst_25 : f32 to vector<8x128xf32>
      %47 = arith.select %44, %45, %46 : vector<8x128xi1>, vector<8x128xf32>
      %48 = vector.broadcast %27 : f32 to vector<8x128xf32>
      %49 = arith.select %39, %48, %47 : vector<8x128xi1>, vector<8x128xf32>
      %c0_26 = arith.constant 0 : index
      %c0_27 = arith.constant 0 : index
      %50 = vector.load %arg4[%c0_26, %c0_27] : memref<8x128xf32, #tpu.memory_space<vmem>>, vector<8x128xf32>
      tpu.vector_store %arg4[%c0_26, %c0_27], %49 {strides = array<i32>} : memref<8x128xf32, #tpu.memory_space<vmem>>, vector<8x128xf32>,
    } else {
    }
    return
  }
  func.func @transform_0(%arg0: i32, %arg1: i32) -> (i32, i32) {
    %c1_i32 = arith.constant 1 : i32
    %0 = arith.muli %arg0, %c1_i32 : i32
    %1 = arith.addi %0, %arg1 : i32
    %c0_i32 = arith.constant 0 : i32
    %2 = arith.minsi %1, %c0_i32 : i32
    %c0_i32_0 = arith.constant 0 : i32
    %c0_i32_1 = arith.constant 0 : i32
    return %2, %c0_i32_0 : i32, i32
  }
  func.func @transform_1(%arg0: i32, %arg1: i32) -> (i32, i32) {
    %c1_i32 = arith.constant 1 : i32
    %0 = arith.muli %arg0, %c1_i32 : i32
    %1 = arith.addi %0, %arg1 : i32
    %c0_i32 = arith.constant 0 : i32
    %2 = arith.minsi %1, %c0_i32 : i32
    %c0_i32_0 = arith.constant 0 : i32
    %c0_i32_1 = arith.constant 0 : i32
    return %2, %c0_i32_0 : i32, i32
  }
  func.func @transform_2(%arg0: i32, %arg1: i32) -> (i32, i32) {
    %c0_i32 = arith.constant 0 : i32
    %c0_i32_0 = arith.constant 0 : i32
    return %arg0, %c0_i32 : i32, i32
  }
}

</mosaic_0001>

<llo_original>
// kernel: dice_loss.1
$region0: #{dice_loss.1}
  #allocation0 [shape = 'u32[]', space=smem, size = 0x4, offset = 0x4, fixed_abs, tag = 'smem constant byte address 0x4 - core index']
  #allocation1 [shape = 'u32[144,128]{1,0:T(1,128)}', space=vmem, size = 0x12000, scoped, tag = 'internal scratch']
  #allocation2 [shape = 'f32[1,2048]{1,0:T(1,128)}', space=vmem, size = 0x2000, scoped, tag = 'scratch operand']
  #allocation3 [shape = 'f32[1,2048]{1,0:T(1,128)}', space=vmem, size = 0x2000, scoped, tag = 'scratch operand']
  %s0 = inlined_call_operand.vmem [shape: f32[1,2048], index: 0, kind: input, shape index: {}]
  %s1 = inlined_call_operand.vmem [shape: f32[1,2048], index: 1, kind: input, shape index: {}]
  %s2 = inlined_call_operand.vmem [shape: f32[8,128], index: 2, kind: output, shape index: {}]
  %s3 = sld [smem:[#allocation0]]
  $region26: #{dice_loss.1} parent=0
    _
  %s5 = ssub.s32 1, %s3
  %s6 = scalar_select 0, %s5, %s3
  // Predicated region
  $region2: #{dice_loss.1} parent=0 // pred_check
    _
  $region3: #{dice_loss.1} parent=0 // pred_check_branch
    %8 = sbr.rel (0) target = $region5
  $region4: #{dice_loss.1} parent=0 // pred_region
    %s9 = sadd.s32 0, 0
    %p10 = scmp.lt.s32.totalorder %s9, 0
    %s11 = scalar_select %p10, %s9, 0
    %p12 = scmp.lt.s32.totalorder %s11, 0
    %s13 = scalar_select %p12, %s11, 0
    %s14 = smul.addr %s13, 16
    %s15 = scalar_lea.vmem %s0, %s14
    %s16 = sadd.s32 0, 0
    %p17 = scmp.lt.s32.totalorder %s16, 0
    %s18 = scalar_select %p17, %s16, 0
  $region5: #{dice_loss.1} parent=0 // pred_fallthru
    _
  // Predicated region
  $region6: #{dice_loss.1} parent=0 // pred_check
    _
  $region7: #{dice_loss.1} parent=0 // pred_check_branch
    %20 = sbr.rel (0) target = $region9
  $region8: #{dice_loss.1} parent=0 // pred_region
    %s21 = sadd.s32 0, 0
    %p22 = scmp.lt.s32.totalorder %s21, 0
    %s23 = scalar_select %p22, %s21, 0
    %p24 = scmp.lt.s32.totalorder %s23, 0
    %s25 = scalar_select %p24, %s23, 0
    %s26 = smul.addr %s25, 16
    %s27 = scalar_lea.vmem %s1, %s26
    %s28 = sadd.s32 0, 0
    %p29 = scmp.lt.s32.totalorder %s28, 0
    %s30 = scalar_select %p29, %s28, 0
  $region9: #{dice_loss.1} parent=0 // pred_fallthru
    _
  %s31 = sadd.s32 0, 0
  %p32 = scmp.lt.s32.totalorder %s31, 0
  %s33 = scalar_select %p32, %s31, 0
  %p34 = scmp.lt.s32.totalorder %s33, 0
  %s35 = scalar_select %p34, %s33, 0
  %s36 = smul.addr %s35, 16
  %s37 = scalar_lea.vmem %s0, %s36
  %s38 = sadd.s32 0, 0
  %p39 = scmp.lt.s32.totalorder %s38, 0
  %s40 = scalar_select %p39, %s38, 0
  %p41 = scmp.lt.s32.totalorder %s40, 0
  %s42 = scalar_select %p41, %s40, 0
  %s43 = smul.addr %s42, 16
  %s44 = scalar_lea.vmem %s1, %s43
  %s45 = sadd.s32 0, 0
  %p46 = scmp.lt.s32.totalorder %s45, 0
  %s47 = scalar_select %p46, %s45, 0
  %p48 = scmp.lt.s32.totalorder %s47, 0
  %s49 = scalar_select %p48, %s47, 0
  %s50 = smul.addr %s49, 16
  %s51 = scalar_lea.vmem %s0, %s50
  %s52 = sadd.s32 0, 0
  %p53 = scmp.lt.s32.totalorder %s52, 0
  %s54 = scalar_select %p53, %s52, 0
  %s55 = sadd.s32 0, 0
  %p56 = scmp.lt.s32.totalorder %s55, 0
  %s57 = scalar_select %p56, %s55, 0
  %p58 = scmp.lt.s32.totalorder %s57, 0
  %s59 = scalar_select %p58, %s57, 0
  %s60 = smul.addr %s59, 16
  %s61 = scalar_lea.vmem %s1, %s60
  %s62 = sadd.s32 0, 0
  %p63 = scmp.lt.s32.totalorder %s62, 0
  %s64 = scalar_select %p63, %s62, 0
  %p65 = scmp.eq.s32.totalorder 0, 0
  // Predicated region
  $region10: #{dice_loss.1} parent=0 // pred_check
    %p66 = pneg %p65
  $region11: #{dice_loss.1} parent=0 // pred_check_branch
    %68 = sbr.rel (%p66) target = $region13
  $region12: #{dice_loss.1} parent=0 // pred_region
    %69 = vst [vmem:[#allocation2] sm:$0xff] 0.0
    %70 = vst [vmem:[#allocation2 + $0x8] sm:$0xff] 0.0
    %71 = vst [vmem:[#allocation3] sm:$0xff] 0.0
    %72 = vst [vmem:[#allocation3 + $0x8] sm:$0xff] 0.0
  $region13: #{dice_loss.1} parent=0 // pred_fallthru
    _
  %v73 = vld [vmem:[%s51] sm:$0xff]
  %v74 = vld [vmem:[%s51 + $0x8] sm:$0xff]
  %v75 = vld [vmem:[%s61] sm:$0xff]
  %v76 = vld [vmem:[%s61 + $0x8] sm:$0xff]
  %v77 = vmul.f32 %v73, 0.5
  %v78 = vmul.f32 %v74, 0.5
  %v79 = vtanh.pop %v77
  %v80 = vtanh.pop %v78
  %v81 = vmul.f32 %v79, 0.5
  %v82 = vmul.f32 %v80, 0.5
  %v83 = vadd.f32 %v81, 0.5
  %v84 = vadd.f32 %v82, 0.5
  %v85 = vmul.f32 %v83, %v75
  %v86 = vmul.f32 %v84, %v76
  %v87 = vadd.f32 %v83, %v75
  %v88 = vadd.f32 %v84, %v76
  %v89 = vld [vmem:[#allocation2] sm:$0xff]
  %v90 = vld [vmem:[#allocation2 + $0x8] sm:$0xff]
  %v91 = vadd.f32 %v89, %v85
  %v92 = vadd.f32 %v90, %v86
  %93 = vst [vmem:[#allocation2] sm:$0xff] %v91
  %94 = vst [vmem:[#allocation2 + $0x8] sm:$0xff] %v92
  %v95 = vld [vmem:[#allocation3] sm:$0xff]
  %v96 = vld [vmem:[#allocation3 + $0x8] sm:$0xff]
  %v97 = vadd.f32 %v95, %v87
  %v98 = vadd.f32 %v96, %v88
  %99 = vst [vmem:[#allocation3] sm:$0xff] %v97
  %100 = vst [vmem:[#allocation3 + $0x8] sm:$0xff] %v98
  // Predicated region
  $region14: #{dice_loss.1} parent=0 // pred_check
    %p101 = pneg %p65
  $region15: #{dice_loss.1} parent=0 // pred_check_branch
    %103 = sbr.rel (%p101) target = $region17
  $region16: #{dice_loss.1} parent=0 // pred_region
    %v104 = vld [vmem:[#allocation2] sm:$0xff]
    %v105 = vld [vmem:[#allocation2 + $0x8] sm:$0xff]
    %v108 = vlaneseq
    %v109 = vshrl.u32 %v108, 7
    %v110 = vsub.s32 0, %v109
    %v111 = vrot.slane %v104, %v110
    %v112 = vlaneseq
    %v113 = vshrl.u32 %v112, 7
    %v114 = vsub.s32 1, %v113
    %v115 = vrot.slane %v104, %v114
    %v116 = vlaneseq
    %v117 = vshrl.u32 %v116, 7
    %v118 = vsub.s32 2, %v117
    %v119 = vrot.slane %v104, %v118
    %v120 = vlaneseq
    %v121 = vshrl.u32 %v120, 7
    %v122 = vsub.s32 3, %v121
    %v123 = vrot.slane %v104, %v122
    %v124 = vlaneseq
    %v125 = vshrl.u32 %v124, 7
    %v126 = vsub.s32 4, %v125
    %v127 = vrot.slane %v104, %v126
    %v128 = vlaneseq
    %v129 = vshrl.u32 %v128, 7
    %v130 = vsub.s32 5, %v129
    %v131 = vrot.slane %v104, %v130
    %v132 = vlaneseq
    %v133 = vshrl.u32 %v132, 7
    %v134 = vsub.s32 6, %v133
    %v135 = vrot.slane %v104, %v134
    %v136 = vlaneseq
    %v137 = vshrl.u32 %v136, 7
    %v138 = vsub.s32 7, %v137
    %v139 = vrot.slane %v104, %v138
    %v140 = vlaneseq
    %v141 = vshrl.u32 %v140, 7
    %v142 = vsub.s32 0, %v141
    %v143 = vrot.slane %v105, %v142
    %v144 = vlaneseq
    %v145 = vshrl.u32 %v144, 7
    %v146 = vsub.s32 1, %v145
    %v147 = vrot.slane %v105, %v146
    %v148 = vlaneseq
    %v149 = vshrl.u32 %v148, 7
    %v150 = vsub.s32 2, %v149
    %v151 = vrot.slane %v105, %v150
    %v152 = vlaneseq
    %v153 = vshrl.u32 %v152, 7
    %v154 = vsub.s32 3, %v153
    %v155 = vrot.slane %v105, %v154
    %v156 = vlaneseq
    %v157 = vshrl.u32 %v156, 7
    %v158 = vsub.s32 4, %v157
    %v159 = vrot.slane %v105, %v158
    %v160 = vlaneseq
    %v161 = vshrl.u32 %v160, 7
    %v162 = vsub.s32 5, %v161
    %v163 = vrot.slane %v105, %v162
    %v164 = vlaneseq
    %v165 = vshrl.u32 %v164, 7
    %v166 = vsub.s32 6, %v165
    %v167 = vrot.slane %v105, %v166
    %v168 = vlaneseq
    %v169 = vshrl.u32 %v168, 7
    %v170 = vsub.s32 7, %v169
    %v171 = vrot.slane %v105, %v170
    %vm188 = vcmask 1040384
    %v189 = vsel %vm188, %v111, 0.0
    %v190 = vsel %vm188, %v115, 0.0
    %v191 = vadd.f32 %v189, %v190
    %v192 = vsel %vm188, %v119, 0.0
    %v193 = vadd.f32 %v191, %v192
    %v194 = vsel %vm188, %v123, 0.0
    %v195 = vadd.f32 %v193, %v194
    %v196 = vsel %vm188, %v127, 0.0
    %v197 = vadd.f32 %v195, %v196
    %v198 = vsel %vm188, %v131, 0.0
    %v199 = vadd.f32 %v197, %v198
    %v200 = vsel %vm188, %v135, 0.0
    %v201 = vadd.f32 %v199, %v200
    %v202 = vsel %vm188, %v139, 0.0
    %v203 = vadd.f32 %v201, %v202
    %v204 = vsel %vm188, %v143, 0.0
    %v205 = vadd.f32 %v203, %v204
    %v206 = vsel %vm188, %v147, 0.0
    %v207 = vadd.f32 %v205, %v206
    %v208 = vsel %vm188, %v151, 0.0
    %v209 = vadd.f32 %v207, %v208
    %v210 = vsel %vm188, %v155, 0.0
    %v211 = vadd.f32 %v209, %v210
    %v212 = vsel %vm188, %v159, 0.0
    %v213 = vadd.f32 %v211, %v212
    %v214 = vsel %vm188, %v163, 0.0
    %v215 = vadd.f32 %v213, %v214
    %v216 = vsel %vm188, %v167, 0.0
    %v217 = vadd.f32 %v215, %v216
    %v218 = vsel %vm188, %v171, 0.0
    %v219 = vadd.f32 %v217, %v218
    %220 = vadd.xlane.f32.xlu0 %v219
    %v221 = vpop.xlane.xlu0 %220
    %v222 = vrot.slane %v221, 4
    %v223 = vadd.f32 %v221, %v222
    %v224 = vrot.slane %v223, 2
    %v225 = vadd.f32 %v223, %v224
    %v226 = vrot.slane %v225, 1
    %v227 = vadd.f32 %v225, %v226
    %s228 = vtos %v227
    %v229 = vld [vmem:[#allocation3] sm:$0xff]
    %v230 = vld [vmem:[#allocation3 + $0x8] sm:$0xff]
    %v233 = vlaneseq
    %v234 = vshrl.u32 %v233, 7
    %v235 = vsub.s32 0, %v234
    %v236 = vrot.slane %v229, %v235
    %v237 = vlaneseq
    %v238 = vshrl.u32 %v237, 7
    %v239 = vsub.s32 1, %v238
    %v240 = vrot.slane %v229, %v239
    %v241 = vlaneseq
    %v242 = vshrl.u32 %v241, 7
    %v243 = vsub.s32 2, %v242
    %v244 = vrot.slane %v229, %v243
    %v245 = vlaneseq
    %v246 = vshrl.u32 %v245, 7
    %v247 = vsub.s32 3, %v246
    %v248 = vrot.slane %v229, %v247
    %v249 = vlaneseq
    %v250 = vshrl.u32 %v249, 7
    %v251 = vsub.s32 4, %v250
    %v252 = vrot.slane %v229, %v251
    %v253 = vlaneseq
    %v254 = vshrl.u32 %v253, 7
    %v255 = vsub.s32 5, %v254
    %v256 = vrot.slane %v229, %v255
    %v257 = vlaneseq
    %v258 = vshrl.u32 %v257, 7
    %v259 = vsub.s32 6, %v258
    %v260 = vrot.slane %v229, %v259
    %v261 = vlaneseq
    %v262 = vshrl.u32 %v261, 7
    %v263 = vsub.s32 7, %v262
    %v264 = vrot.slane %v229, %v263
    %v265 = vlaneseq
    %v266 = vshrl.u32 %v265, 7
    %v267 = vsub.s32 0, %v266
    %v268 = vrot.slane %v230, %v267
    %v269 = vlaneseq
    %v270 = vshrl.u32 %v269, 7
    %v271 = vsub.s32 1, %v270
    %v272 = vrot.slane %v230, %v271
    %v273 = vlaneseq
    %v274 = vshrl.u32 %v273, 7
    %v275 = vsub.s32 2, %v274
    %v276 = vrot.slane %v230, %v275
    %v277 = vlaneseq
    %v278 = vshrl.u32 %v277, 7
    %v279 = vsub.s32 3, %v278
    %v280 = vrot.slane %v230, %v279
    %v281 = vlaneseq
    %v282 = vshrl.u32 %v281, 7
    %v283 = vsub.s32 4, %v282
    %v284 = vrot.slane %v230, %v283
    %v285 = vlaneseq
    %v286 = vshrl.u32 %v285, 7
    %v287 = vsub.s32 5, %v286
    %v288 = vrot.slane %v230, %v287
    %v289 = vlaneseq
    %v290 = vshrl.u32 %v289, 7
    %v291 = vsub.s32 6, %v290
    %v292 = vrot.slane %v230, %v291
    %v293 = vlaneseq
    %v294 = vshrl.u32 %v293, 7
    %v295 = vsub.s32 7, %v294
    %v296 = vrot.slane %v230, %v295
    %v313 = vsel %vm188, %v236, 0.0
    %v314 = vsel %vm188, %v240, 0.0
    %v315 = vadd.f32 %v313, %v314
    %v316 = vsel %vm188, %v244, 0.0
    %v317 = vadd.f32 %v315, %v316
    %v318 = vsel %vm188, %v248, 0.0
    %v319 = vadd.f32 %v317, %v318
    %v320 = vsel %vm188, %v252, 0.0
    %v321 = vadd.f32 %v319, %v320
    %v322 = vsel %vm188, %v256, 0.0
    %v323 = vadd.f32 %v321, %v322
    %v324 = vsel %vm188, %v260, 0.0
    %v325 = vadd.f32 %v323, %v324
    %v326 = vsel %vm188, %v264, 0.0
    %v327 = vadd.f32 %v325, %v326
    %v328 = vsel %vm188, %v268, 0.0
    %v329 = vadd.f32 %v327, %v328
    %v330 = vsel %vm188, %v272, 0.0
    %v331 = vadd.f32 %v329, %v330
    %v332 = vsel %vm188, %v276, 0.0
    %v333 = vadd.f32 %v331, %v332
    %v334 = vsel %vm188, %v280, 0.0
    %v335 = vadd.f32 %v333, %v334
    %v336 = vsel %vm188, %v284, 0.0
    %v337 = vadd.f32 %v335, %v336
    %v338 = vsel %vm188, %v288, 0.0
    %v339 = vadd.f32 %v337, %v338
    %v340 = vsel %vm188, %v292, 0.0
    %v341 = vadd.f32 %v339, %v340
    %v342 = vsel %vm188, %v296, 0.0
    %v343 = vadd.f32 %v341, %v342
    %344 = vadd.xlane.f32.xlu0 %v343
    %v345 = vpop.xlane.xlu0 %344
    %v346 = vrot.slane %v345, 4
    %v347 = vadd.f32 %v345, %v346
    %v348 = vrot.slane %v347, 2
    %v349 = vadd.f32 %v347, %v348
    %v350 = vrot.slane %v349, 1
    %v351 = vadd.f32 %v349, %v350
    %s352 = vtos %v351
    %v353 = vlaneseq
    %v354 = vshrl.u32 %v353, 7
    %v355 = vlaneseq
    %v356 = vand.u32 %v355, 127
    %vm357 = vcmp.eq.s32.totalorder %v354, 0
    %vm358 = vcmp.eq.s32.totalorder %v356, 0
    %vm359 = vmand %vm357, %vm358
    %vm360 = vcmp.eq.s32.totalorder %v356, 1
    %vm361 = vmand %vm357, %vm360
    %v362 = vstv %s352
    %v363 = vsel %vm361, %v362, 0.0
    %v364 = vstv %s228
    %v365 = vsel %vm359, %v364, %v363
    %366 = vst [vmem:[%s2] sm:$0xff] %v365
  $region17: #{dice_loss.1} parent=0 // pred_fallthru
    _
  // Predicated region
  $region18: #{dice_loss.1} parent=0 // pred_check
    _
  $region19: #{dice_loss.1} parent=0 // pred_check_branch
    %368 = sbr.rel (0) target = $region21
  $region20: #{dice_loss.1} parent=0 // pred_region
    _
  $region21: #{dice_loss.1} parent=0 // pred_fallthru
    _
  // Predicated region
  $region22: #{dice_loss.1} parent=0 // pred_check
    _
  $region23: #{dice_loss.1} parent=0 // pred_check_branch
    %370 = sbr.rel (0) target = $region25
  $region24: #{dice_loss.1} parent=0 // pred_region
    _
  $region25: #{dice_loss.1} parent=0 // pred_fallthru
    _

</llo_original>
